<compile_context>
chip_gen: v7x
topology: tpu7x:2x2x1
jax: 0.10.0
libtpu: 0.0.40
codegen_flags: <defaults>
</compile_context>

<pallas_src>
import functools

import jax
import jax.numpy as jnp
from jax.experimental import pallas as pl
from jax.experimental.pallas import tpu as pltpu

HIDDEN_SIZE = 100
NUM_LAYERS = 4

# Hardware-friendly padded sizes (lane width = 128).
IN_PAD = 128    # obs_num padded
H_PAD = 128     # HIDDEN_SIZE padded
OUT_PAD = 128   # action_num padded -> lane-dense output store

_MAX_BATCH_TILE = 1024   # batch tile for the gridded (large-B) path
_GRID_THRESHOLD = 1024   # below/at this, a grid is pure per-step overhead


def _round_up(x, m):
    return (x + m - 1) // m * m


def _mlp_kernel(x_ref, w_ref, b_ref, o_ref, xpad_ref):
    """Fused 4-layer MLP, all operands VMEM-resident.

    x_ref:    (TB, obs_num)   f32 raw observations (lane-narrow)
    w_ref:    (4, 128, 128)   bf16, pre-transposed (in, out), zero-padded
    b_ref:    (4, 1, 128)     f32, zero-padded
    o_ref:    (TB, OUT_PAD)   bf16 (lane-dense unmasked store)
    xpad_ref: (TB, IN_PAD)    f32 scratch for in-kernel zero-pad of the input
    """
    obs = x_ref.shape[-1]
    # Fused zero-pad: lanes [obs:128) stay zero; zero weight rows / bias lanes
    # plus ReLU(0)=0 keep all padded lanes exactly zero through every layer.
    xpad_ref[...] = jnp.zeros_like(xpad_ref)
    xpad_ref[:, :obs] = x_ref[...]
    h = xpad_ref[...].astype(jnp.bfloat16)

    for layer in range(NUM_LAYERS):
        acc = jnp.dot(h, w_ref[layer], preferred_element_type=jnp.float32)
        # bias-add / ReLU stay in f32 (v5e VPU has no bf16 elementwise).
        acc = jnp.maximum(acc + b_ref[layer], 0.0)
        if layer < NUM_LAYERS - 1:
            h = acc.astype(jnp.bfloat16)          # bf16 MXU operands next layer
        else:
            o_ref[...] = acc.astype(o_ref.dtype)  # single bf16 128-lane store


@functools.partial(jax.jit, static_argnames=("action_num",))
def nn_forward(x, params, action_num):
    """x: (B, obs_num) float32 -> (B, action_num) float32."""
    B, obs_num = x.shape
    w = params["w_packed"]   # bf16 (4, 128, 128)
    b = params["b_packed"]   # f32  (4, 1, 128)

    if B <= _GRID_THRESHOLD:
        # Small / medium batch: one fused, grid-less, fully VMEM-resident call.
        out = pl.pallas_call(
            _mlp_kernel,
            out_shape=jax.ShapeDtypeStruct((B, OUT_PAD), jnp.bfloat16),
            in_specs=[pl.BlockSpec(memory_space=pltpu.MemorySpace.VMEM)] * 3,
            out_specs=pl.BlockSpec(memory_space=pltpu.MemorySpace.VMEM),
            scratch_shapes=[pltpu.VMEM((B, IN_PAD), jnp.float32)],
        )(x, w, b)
    else:
        # Large (vectorized-env) batch: 1-D grid over batch tiles; weights and
        # biases stay resident (index_map always returns block 0).  Tile is as
        # large as possible (mem-bound) but capped so there are >= 2 grid steps
        # to keep both v7x TensorCores busy via the "parallel" axis.
        tb = min(_MAX_BATCH_TILE, _round_up(pl.cdiv(B, 2), 256))
        b_pad = _round_up(B, tb)
        xg = jnp.pad(x, ((0, b_pad - B), (0, 0))) if b_pad != B else x
        out = pl.pallas_call(
            _mlp_kernel,
            out_shape=jax.ShapeDtypeStruct((b_pad, OUT_PAD), jnp.bfloat16),
            grid=(b_pad // tb,),
            in_specs=[
                pl.BlockSpec((tb, obs_num), lambda i: (i, 0)),
                pl.BlockSpec((NUM_LAYERS, H_PAD, H_PAD), lambda i: (0, 0, 0)),
                pl.BlockSpec((NUM_LAYERS, 1, H_PAD), lambda i: (0, 0, 0)),
            ],
            out_specs=pl.BlockSpec((tb, OUT_PAD), lambda i: (i, 0)),
            scratch_shapes=[pltpu.VMEM((tb, IN_PAD), jnp.float32)],
            compiler_params=pltpu.CompilerParams(
                dimension_semantics=("parallel",)),
        )(xg, w, b)
        out = out[:B]

    # Cast back to f32 only after slicing off the padded lanes.
    return out[:, :action_num].astype(jnp.float32)


def init_params(key, obs_num, action_num):
    """PyTorch nn.Linear-style init (U[-1/sqrt(fan_in), +1/sqrt(fan_in)]).

    Weights are stored pre-transposed as (in, out) = PyTorch weight.T, packed
    and zero-padded into one bf16[4,128,128] buffer; biases into f32[4,1,128].
    Unpadded f32 copies are kept for the pure-f32 reference.
    """
    dims = [(obs_num, HIDDEN_SIZE),
            (HIDDEN_SIZE, HIDDEN_SIZE),
            (HIDDEN_SIZE, HIDDEN_SIZE),
            (HIDDEN_SIZE, action_num)]
    params = {}
    w_packed = jnp.zeros((NUM_LAYERS, H_PAD, H_PAD), jnp.float32)
    b_packed = jnp.zeros((NUM_LAYERS, 1, H_PAD), jnp.float32)
    for i, (fan_in, fan_out) in enumerate(dims):
        key, kw, kb = jax.random.split(key, 3)
        bound = 1.0 / (fan_in ** 0.5)
        w = jax.random.uniform(kw, (fan_in, fan_out), jnp.float32, -bound, bound)
        bias = jax.random.uniform(kb, (fan_out,), jnp.float32, -bound, bound)
        params[f"w{i + 1}"] = w
        params[f"b{i + 1}"] = bias
        w_packed = w_packed.at[i, :fan_in, :fan_out].set(w)
        b_packed = b_packed.at[i, 0, :fan_out].set(bias)
    params["w_packed"] = w_packed.astype(jnp.bfloat16)
    params["b_packed"] = b_packed
    return params


def nn_forward_ref_f32(x, params):
    """Pure-f32 reference of the original PyTorch module."""
    h = x
    for i in range(1, NUM_LAYERS + 1):
        h = jnp.maximum(h @ params[f"w{i}"] + params[f"b{i}"], 0.0)
    return h


def nn_forward_ref_bf16(x, params, action_num):
    """Reference matching the kernel's bf16-operand / f32-accum / bf16-store math."""
    B, obs_num = x.shape
    h = jnp.zeros((B, IN_PAD), jnp.float32).at[:, :obs_num].set(x)
    h = h.astype(jnp.bfloat16)
    w, b = params["w_packed"], params["b_packed"]
    for i in range(NUM_LAYERS):
        acc = jnp.maximum(
            jnp.dot(h, w[i], preferred_element_type=jnp.float32) + b[i], 0.0)
        h = acc.astype(jnp.bfloat16)
    return h[:, :action_num].astype(jnp.float32)


if __name__ == "__main__":
    # Acrobot-v1: observation dim 6, action dim 3.
    OBS_NUM, ACTION_NUM = 6, 3

    key = jax.random.PRNGKey(0)
    key, kx = jax.random.split(key)
    params = init_params(key, OBS_NUM, ACTION_NUM)

    # Small (latency-bound) batch: grid-less fused path, no host-side pad/cast.
    x_small = jax.random.normal(kx, (8, OBS_NUM), dtype=jnp.float32)
    out_small = jax.block_until_ready(nn_forward(x_small, params, ACTION_NUM))
    assert out_small.shape == (8, ACTION_NUM)
    ref_small = nn_forward_ref_bf16(x_small, params, ACTION_NUM)
    assert jnp.allclose(out_small, ref_small, atol=2e-2, rtol=2e-2)
    # Loose sanity check against the original full-f32 semantics.
    f32_small = nn_forward_ref_f32(x_small, params)
    assert float(jnp.max(jnp.abs(out_small - f32_small))) < 0.25

    # Large (vectorized-env) batch: exercises the batch-grid / parallel path
    # (tile capped so the grid has >= 2 steps for v7x's two TensorCores).
    key, kx2 = jax.random.split(key)
    x_big = jax.random.normal(kx2, (2048, OBS_NUM), dtype=jnp.float32)
    out_big = jax.block_until_ready(nn_forward(x_big, params, ACTION_NUM))
    assert out_big.shape == (2048, ACTION_NUM)
    ref_big = nn_forward_ref_bf16(x_big, params, ACTION_NUM)
    assert jnp.allclose(out_big, ref_big, atol=2e-2, rtol=2e-2)

    print("KERNEL_OK")
</pallas_src>

<mosaic_0001>
module attributes {stable_mosaic.version = 11 : i64} {
  func.func @_mlp_kernel(%arg0: memref<8x6xf32, #tpu.memory_space<vmem>>, %arg1: memref<4x128x128xbf16, #tpu.memory_space<vmem>>, %arg2: memref<4x1x128xf32, #tpu.memory_space<vmem>>, %arg3: memref<8x128xbf16, #tpu.memory_space<vmem>>, %arg4: memref<8x128xf32, #tpu.memory_space<vmem>>) attributes {dimension_semantics = [], scalar_prefetch = 0 : i64, scratch_operands = 1 : i64, tpu.core_type = #tpu.core_type<tc>} {
    %cst = arith.constant 0.000000e+00 : f32
    %0 = vector.broadcast %cst : f32 to vector<8x128xf32>
    %c0 = arith.constant 0 : index
    %c0_0 = arith.constant 0 : index
    %1 = vector.load %arg4[%c0, %c0_0] : memref<8x128xf32, #tpu.memory_space<vmem>>, vector<8x128xf32>
    tpu.vector_store %arg4[%c0, %c0_0], %0 {strides = array<i32>} : memref<8x128xf32, #tpu.memory_space<vmem>>, vector<8x128xf32>,
    %c0_1 = arith.constant 0 : index
    %c0_2 = arith.constant 0 : index
    %2 = vector.load %arg0[%c0_1, %c0_2] : memref<8x6xf32, #tpu.memory_space<vmem>>, vector<8x6xf32>
    %c0_3 = arith.constant 0 : index
    %c0_4 = arith.constant 0 : index
    %3 = vector.load %arg4[%c0_3, %c0_4] : memref<8x128xf32, #tpu.memory_space<vmem>>, vector<8x6xf32>
    tpu.vector_store %arg4[%c0_3, %c0_4], %2 {strides = array<i32>} : memref<8x128xf32, #tpu.memory_space<vmem>>, vector<8x6xf32>,
    %c0_5 = arith.constant 0 : index
    %c0_6 = arith.constant 0 : index
    %4 = vector.load %arg4[%c0_5, %c0_6] : memref<8x128xf32, #tpu.memory_space<vmem>>, vector<8x128xf32>
    %5 = arith.truncf %4 : vector<8x128xf32> to vector<8x128xbf16>
    %c0_7 = arith.constant 0 : index
    %c0_8 = arith.constant 0 : index
    %c0_9 = arith.constant 0 : index
    %6 = vector.load %arg1[%c0_7, %c0_8, %c0_9] : memref<4x128x128xbf16, #tpu.memory_space<vmem>>, vector<1x128x128xbf16>
    %7 = vector.shape_cast %6 : vector<1x128x128xbf16> to vector<128x128xbf16>
    %cst_10 = arith.constant dense<0.000000e+00> : vector<8x128xf32>
    %8 = tpu.matmul %5, %7, %cst_10 {dimension_numbers = #tpu.dot_dimension_numbers<[1], [0], [0], [1], [0, 0, 1, 1], [], []>} : vector<8x128xbf16>, vector<128x128xbf16>, vector<8x128xf32> -> vector<8x128xf32>
    %c0_11 = arith.constant 0 : index
    %c0_12 = arith.constant 0 : index
    %c0_13 = arith.constant 0 : index
    %9 = vector.load %arg2[%c0_11, %c0_12, %c0_13] : memref<4x1x128xf32, #tpu.memory_space<vmem>>, vector<1x1x128xf32>
    %10 = vector.shape_cast %9 : vector<1x1x128xf32> to vector<1x128xf32>
    %11 = vector.broadcast %10 : vector<1x128xf32> to vector<8x128xf32>
    %12 = arith.addf %8, %11 : vector<8x128xf32>
    %cst_14 = arith.constant 0.000000e+00 : f32
    %13 = vector.broadcast %cst_14 : f32 to vector<8x128xf32>
    %14 = arith.maximumf %12, %13 : vector<8x128xf32>
    %15 = arith.truncf %14 : vector<8x128xf32> to vector<8x128xbf16>
    %c1 = arith.constant 1 : index
    %c0_15 = arith.constant 0 : index
    %c0_16 = arith.constant 0 : index
    %16 = vector.load %arg1[%c1, %c0_15, %c0_16] : memref<4x128x128xbf16, #tpu.memory_space<vmem>>, vector<1x128x128xbf16>
    %17 = vector.shape_cast %16 : vector<1x128x128xbf16> to vector<128x128xbf16>
    %cst_17 = arith.constant dense<0.000000e+00> : vector<8x128xf32>
    %18 = tpu.matmul %15, %17, %cst_17 {dimension_numbers = #tpu.dot_dimension_numbers<[1], [0], [0], [1], [0, 0, 1, 1], [], []>} : vector<8x128xbf16>, vector<128x128xbf16>, vector<8x128xf32> -> vector<8x128xf32>
    %c1_18 = arith.constant 1 : index
    %c0_19 = arith.constant 0 : index
    %c0_20 = arith.constant 0 : index
    %19 = vector.load %arg2[%c1_18, %c0_19, %c0_20] : memref<4x1x128xf32, #tpu.memory_space<vmem>>, vector<1x1x128xf32>
    %20 = vector.shape_cast %19 : vector<1x1x128xf32> to vector<1x128xf32>
    %21 = vector.broadcast %20 : vector<1x128xf32> to vector<8x128xf32>
    %22 = arith.addf %18, %21 : vector<8x128xf32>
    %cst_21 = arith.constant 0.000000e+00 : f32
    %23 = vector.broadcast %cst_21 : f32 to vector<8x128xf32>
    %24 = arith.maximumf %22, %23 : vector<8x128xf32>
    %25 = arith.truncf %24 : vector<8x128xf32> to vector<8x128xbf16>
    %c2 = arith.constant 2 : index
    %c0_22 = arith.constant 0 : index
    %c0_23 = arith.constant 0 : index
    %26 = vector.load %arg1[%c2, %c0_22, %c0_23] : memref<4x128x128xbf16, #tpu.memory_space<vmem>>, vector<1x128x128xbf16>
    %27 = vector.shape_cast %26 : vector<1x128x128xbf16> to vector<128x128xbf16>
    %cst_24 = arith.constant dense<0.000000e+00> : vector<8x128xf32>
    %28 = tpu.matmul %25, %27, %cst_24 {dimension_numbers = #tpu.dot_dimension_numbers<[1], [0], [0], [1], [0, 0, 1, 1], [], []>} : vector<8x128xbf16>, vector<128x128xbf16>, vector<8x128xf32> -> vector<8x128xf32>
    %c2_25 = arith.constant 2 : index
    %c0_26 = arith.constant 0 : index
    %c0_27 = arith.constant 0 : index
    %29 = vector.load %arg2[%c2_25, %c0_26, %c0_27] : memref<4x1x128xf32, #tpu.memory_space<vmem>>, vector<1x1x128xf32>
    %30 = vector.shape_cast %29 : vector<1x1x128xf32> to vector<1x128xf32>
    %31 = vector.broadcast %30 : vector<1x128xf32> to vector<8x128xf32>
    %32 = arith.addf %28, %31 : vector<8x128xf32>
    %cst_28 = arith.constant 0.000000e+00 : f32
    %33 = vector.broadcast %cst_28 : f32 to vector<8x128xf32>
    %34 = arith.maximumf %32, %33 : vector<8x128xf32>
    %35 = arith.truncf %34 : vector<8x128xf32> to vector<8x128xbf16>
    %c3 = arith.constant 3 : index
    %c0_29 = arith.constant 0 : index
    %c0_30 = arith.constant 0 : index
    %36 = vector.load %arg1[%c3, %c0_29, %c0_30] : memref<4x128x128xbf16, #tpu.memory_space<vmem>>, vector<1x128x128xbf16>
    %37 = vector.shape_cast %36 : vector<1x128x128xbf16> to vector<128x128xbf16>
    %cst_31 = arith.constant dense<0.000000e+00> : vector<8x128xf32>
    %38 = tpu.matmul %35, %37, %cst_31 {dimension_numbers = #tpu.dot_dimension_numbers<[1], [0], [0], [1], [0, 0, 1, 1], [], []>} : vector<8x128xbf16>, vector<128x128xbf16>, vector<8x128xf32> -> vector<8x128xf32>
    %c3_32 = arith.constant 3 : index
    %c0_33 = arith.constant 0 : index
    %c0_34 = arith.constant 0 : index
    %39 = vector.load %arg2[%c3_32, %c0_33, %c0_34] : memref<4x1x128xf32, #tpu.memory_space<vmem>>, vector<1x1x128xf32>
    %40 = vector.shape_cast %39 : vector<1x1x128xf32> to vector<1x128xf32>
    %41 = vector.broadcast %40 : vector<1x128xf32> to vector<8x128xf32>
    %42 = arith.addf %38, %41 : vector<8x128xf32>
    %cst_35 = arith.constant 0.000000e+00 : f32
    %43 = vector.broadcast %cst_35 : f32 to vector<8x128xf32>
    %44 = arith.maximumf %42, %43 : vector<8x128xf32>
    %45 = arith.truncf %44 : vector<8x128xf32> to vector<8x128xbf16>
    %c0_36 = arith.constant 0 : index
    %c0_37 = arith.constant 0 : index
    %46 = vector.load %arg3[%c0_36, %c0_37] : memref<8x128xbf16, #tpu.memory_space<vmem>>, vector<8x128xbf16>
    tpu.vector_store %arg3[%c0_36, %c0_37], %45 {strides = array<i32>} : memref<8x128xbf16, #tpu.memory_space<vmem>>, vector<8x128xbf16>,
    return
  }
}

</mosaic_0001>

<llo_original>
// kernel: nn_forward.1
$region0: #{nn_forward.1}
  #allocation0 [shape = 'u32[]', space=smem, size = 0x4, offset = 0x4, fixed_abs, tag = 'smem constant byte address 0x4 - core index']
  #allocation1 [shape = 'u32[144,128]{1,0:T(1,128)}', space=vmem, size = 0x12000, scoped, tag = 'internal scratch']
  #allocation2 [shape = 'f32[8,128]{1,0:T(8,128)}', space=vmem, size = 0x1000, scoped, tag = 'scratch operand']
  %s0 = inlined_call_operand.hbm [shape: f32[8,6], index: 0, kind: input, shape index: {}]
  %s1 = inlined_call_operand.hbm [shape: bf16[4,128,128], index: 1, kind: input, shape index: {}]
  %s2 = inlined_call_operand.hbm [shape: f32[4,1,128], index: 2, kind: input, shape index: {}]
  %s3 = inlined_call_operand.vmem [shape: bf16[8,128], index: 3, kind: output, shape index: {}]
  %s4 = sld [smem:[#allocation0]]
  $region34: #{nn_forward.1} parent=0
    _
  %s6 = ssub.s32 1, %s4
  %s7 = scalar_select 0, %s6, %s4
  $region1: #{nn_forward.1} parent=0
    #allocation3 [shape = 'u8[4096]{0}', space=vmem, size = 0x1000, scoped, tag = 'input window, operand 0, single buffered']
    #allocation4 [shape = 's32[1]{0}', space=sflag, size = 0x4, scoped, tag = 'scoped memory for nn_forward.1']
    #allocation5 [shape = 'u8[131072]{0}', space=vmem, size = 0x20000, scoped, tag = 'input window, operand 1, single buffered']
    #allocation6 [shape = 's32[1]{0}', space=sflag, size = 0x4, scoped, tag = 'scoped memory for nn_forward.1']
    #allocation7 [shape = 'u8[2048]{0}', space=vmem, size = 0x800, scoped, tag = 'input window, operand 2, single buffered']
    %8 = vsyncpa [#allocation4], 0
    %9 = vsyncpa [#allocation6], 0
    // Predicated region
    $region2: #{nn_forward.1} parent=1 // pred_check
      _
    $region3: #{nn_forward.1} parent=1 // pred_check_branch
      %11 = sbr.rel (0) target = $region5
    $region4: #{nn_forward.1} parent=1 // pred_region
      %s13 = ssub.s32 128, 128
      %14 = vsyncadd [#allocation4], %s13
      %s16 = sshll.u32 [#allocation3], 4
      %s17 = int_to_ptr.vmem [resolvable:$true] %s16
      %19 = dma.hbm_to_vmem [thread:$0]  %s0, 128, %s17, [#allocation4]
    $region5: #{nn_forward.1} parent=1 // pred_fallthru
      _
    // Predicated region
    $region6: #{nn_forward.1} parent=1 // pred_check
      _
    $region7: #{nn_forward.1} parent=1 // pred_check_branch
      %21 = sbr.rel (0) target = $region9
    $region8: #{nn_forward.1} parent=1 // pred_region
      %s23 = ssub.s32 4096, 4096
      %24 = vsyncadd [#allocation6], %s23
      %s25 = sshll.u32 [#allocation5], 4
      %s26 = int_to_ptr.vmem [resolvable:$true] %s25
      %31 = dma.hbm_to_vmem [thread:$0]  %s1, 4096, %s26, [#allocation6], 64, 64, 4
    $region9: #{nn_forward.1} parent=1 // pred_fallthru
      _
    // Predicated region
    $region10: #{nn_forward.1} parent=1 // pred_check
      _
    $region11: #{nn_forward.1} parent=1 // pred_check_branch
      %33 = sbr.rel (0) target = $region13
    $region12: #{nn_forward.1} parent=1 // pred_region
      %s35 = ssub.s32 64, 64
      %36 = vsyncadd [#allocation6], %s35
      %s37 = sshll.u32 [#allocation7], 4
      %s38 = int_to_ptr.vmem [resolvable:$true] %s37
      %43 = dma.hbm_to_vmem [thread:$0]  %s2, 64, %s38, [#allocation6], 16, 16, 1
    $region13: #{nn_forward.1} parent=1 // pred_fallthru
      _
    // Predicated region
    $region14: #{nn_forward.1} parent=1 // pred_check
      _
    $region15: #{nn_forward.1} parent=1 // pred_check_branch
      %45 = sbr.rel (0) target = $region17
    $region16: #{nn_forward.1} parent=1 // pred_region
      %46 = dma.done [#allocation4], 128
    $region17: #{nn_forward.1} parent=1 // pred_fallthru
      _
    // Predicated region
    $region18: #{nn_forward.1} parent=1 // pred_check
      _
    $region19: #{nn_forward.1} parent=1 // pred_check_branch
      %48 = sbr.rel (0) target = $region21
    $region20: #{nn_forward.1} parent=1 // pred_region
      %49 = dma.done [#allocation6], 4096
    $region21: #{nn_forward.1} parent=1 // pred_fallthru
      _
    // Predicated region
    $region22: #{nn_forward.1} parent=1 // pred_check
      _
    $region23: #{nn_forward.1} parent=1 // pred_check_branch
      %51 = sbr.rel (0) target = $region25
    $region24: #{nn_forward.1} parent=1 // pred_region
      %52 = dma.done [#allocation6], 64
    $region25: #{nn_forward.1} parent=1 // pred_fallthru
      _
    %54 = vst [vmem:[#allocation2] sm:$0xff] 0.0
    %v55 = vld [vmem:[#allocation3] sm:$0xff]
    %vm56 = vcmask 48128
    %57 = vst.msk [vmem:[#allocation2] sm:$0xff] %vm56, %v55
    %v58 = vld [vmem:[#allocation2] sm:$0xff]
    %v59 = vpack.c.bf16 %v58, %v58
    %v60 = vld [vmem:[#allocation5] sm:$0xf]
    %v61 = vld [vmem:[#allocation5 + $0x4] sm:$0xf]
    %v62 = vld [vmem:[#allocation5 + $0x8] sm:$0xf]
    %v63 = vld [vmem:[#allocation5 + $0xc] sm:$0xf]
    %v64 = vld [vmem:[#allocation5 + $0x10] sm:$0xf]
    %v65 = vld [vmem:[#allocation5 + $0x14] sm:$0xf]
    %v66 = vld [vmem:[#allocation5 + $0x18] sm:$0xf]
    %v67 = vld [vmem:[#allocation5 + $0x1c] sm:$0xf]
    %v68 = vld [vmem:[#allocation5 + $0x20] sm:$0xf]
    %v69 = vld [vmem:[#allocation5 + $0x24] sm:$0xf]
    %v70 = vld [vmem:[#allocation5 + $0x28] sm:$0xf]
    %v71 = vld [vmem:[#allocation5 + $0x2c] sm:$0xf]
    %v72 = vld [vmem:[#allocation5 + $0x30] sm:$0xf]
    %v73 = vld [vmem:[#allocation5 + $0x34] sm:$0xf]
    %v74 = vld [vmem:[#allocation5 + $0x38] sm:$0xf]
    %v75 = vld [vmem:[#allocation5 + $0x3c] sm:$0xf]
    %v76 = vld [vmem:[#allocation7] sm:$0x1]
    %v78 = vlaneseq
    %v79 = vshrl.u32 %v78, 7
    %v80 = vsub.s32 0, %v79
    %v81 = vrot.slane %v76, %v80
    %v99 = vunpack.c.l.b16 %v60
    %v100 = vunpack.c.l.b16 %v61
    %v101 = vunpack.c.l.b16 %v62
    %v102 = vunpack.c.l.b16 %v63
    %v103 = vunpack.c.l.b16 %v64
    %v104 = vunpack.c.l.b16 %v65
    %v105 = vunpack.c.l.b16 %v66
    %v106 = vunpack.c.l.b16 %v67
    %v107 = vunpack.c.l.b16 %v68
    %v108 = vunpack.c.l.b16 %v69
    %v109 = vunpack.c.l.b16 %v70
    %v110 = vunpack.c.l.b16 %v71
    %v111 = vunpack.c.l.b16 %v72
    %v112 = vunpack.c.l.b16 %v73
    %v113 = vunpack.c.l.b16 %v74
    %v114 = vunpack.c.l.b16 %v75
    %v115 = vpack.c.b16 %v100, %v99
    %v116 = vpack.c.b16 %v102, %v101
    %v117 = vpack.c.b16 %v104, %v103
    %v118 = vpack.c.b16 %v106, %v105
    %v119 = vpack.c.b16 %v108, %v107
    %v120 = vpack.c.b16 %v110, %v109
    %v121 = vpack.c.b16 %v112, %v111
    %v122 = vpack.c.b16 %v114, %v113
    %131 = vmatprep.subr.bf16.mxu0 0
    %132 = vmatpush1.bf16.msra.mxu0 %v115
    %133 = vmatprep.subr.bf16.mxu0 0
    %134 = vmatpush1.bf16.msra.mxu0 %v116
    %135 = vmatprep.subr.bf16.mxu0 0
    %136 = vmatpush1.bf16.msra.mxu0 %v117
    %137 = vmatprep.subr.bf16.mxu0 0
    %138 = vmatpush1.bf16.msra.mxu0 %v118
    %139 = vmatprep.subr.bf16.mxu0 0
    %140 = vmatpush1.bf16.msra.mxu0 %v119
    %141 = vmatprep.subr.bf16.mxu0 0
    %142 = vmatpush1.bf16.msra.mxu0 %v120
    %143 = vmatprep.subr.bf16.mxu0 0
    %144 = vmatpush1.bf16.msra.mxu0 %v121
    %145 = vmatprep.subr.bf16.mxu0 0
    %146 = vmatpush1.bf16.msra.mxu0 %v122
    %147 = vmatprep.subr.bf16.mxu0 0
    %148 = vmatpush1.bf16.msra.mxu0 0
    %149 = vmatprep.subr.bf16.mxu0 0
    %150 = vmatpush1.bf16.msra.mxu0 0
    %151 = vmatprep.subr.bf16.mxu0 0
    %152 = vmatpush1.bf16.msra.mxu0 0
    %153 = vmatprep.subr.bf16.mxu0 0
    %154 = vmatpush1.bf16.msra.mxu0 0
    %155 = vmatprep.subr.bf16.mxu0 0
    %156 = vmatpush1.bf16.msra.mxu0 0
    %157 = vmatprep.subr.bf16.mxu0 0
    %158 = vmatpush1.bf16.msra.mxu0 0
    %159 = vmatprep.subr.bf16.mxu0 0
    %160 = vmatpush1.bf16.msra.mxu0 0
    %161 = vmatprep.subr.bf16.mxu0 0
    %162 = vmatpush1.bf16.msra.mxu0 0
    %163 = vmatprep.mubr.bf16.mxu0 0
    %164 = vmatmul.mubr.bf16.gmra.mrb[0].mxu0 %v59
    %v165 = vpop.f32.mrb[0].mxu0
    %v166 = vadd.f32 %v81, %v165
    %v167 = vpop.f32.mrb[0].mxu0
    %v168 = vpop.f32.mrb[0].mxu0
    %v169 = vpop.f32.mrb[0].mxu0
    %170 = vdwg.mxu0
    %v171 = vmax.f32 %v166, 0.0
    %v172 = vpack.c.bf16 %v171, %v171
    %s173 = scalar_lea.vmem [#allocation5], 64
    %v174 = vld [vmem:[%s173] sm:$0xf]
    %v175 = vld [vmem:[%s173 + $0x4] sm:$0xf]
    %v176 = vld [vmem:[%s173 + $0x8] sm:$0xf]
    %v177 = vld [vmem:[%s173 + $0xc] sm:$0xf]
    %v178 = vld [vmem:[%s173 + $0x10] sm:$0xf]
    %v179 = vld [vmem:[%s173 + $0x14] sm:$0xf]
    %v180 = vld [vmem:[%s173 + $0x18] sm:$0xf]
    %v181 = vld [vmem:[%s173 + $0x1c] sm:$0xf]
    %v182 = vld [vmem:[%s173 + $0x20] sm:$0xf]
    %v183 = vld [vmem:[%s173 + $0x24] sm:$0xf]
    %v184 = vld [vmem:[%s173 + $0x28] sm:$0xf]
    %v185 = vld [vmem:[%s173 + $0x2c] sm:$0xf]
    %v186 = vld [vmem:[%s173 + $0x30] sm:$0xf]
    %v187 = vld [vmem:[%s173 + $0x34] sm:$0xf]
    %v188 = vld [vmem:[%s173 + $0x38] sm:$0xf]
    %v189 = vld [vmem:[%s173 + $0x3c] sm:$0xf]
    %s190 = scalar_lea.vmem [#allocation7], 1
    %v191 = vld [vmem:[%s190] sm:$0x1]
    %v193 = vlaneseq
    %v194 = vshrl.u32 %v193, 7
    %v195 = vsub.s32 0, %v194
    %v196 = vrot.slane %v191, %v195
    %v214 = vunpack.c.l.b16 %v174
    %v215 = vunpack.c.l.b16 %v175
    %v216 = vunpack.c.l.b16 %v176
    %v217 = vunpack.c.l.b16 %v177
    %v218 = vunpack.c.l.b16 %v178
    %v219 = vunpack.c.l.b16 %v179
    %v220 = vunpack.c.l.b16 %v180
    %v221 = vunpack.c.l.b16 %v181
    %v222 = vunpack.c.l.b16 %v182
    %v223 = vunpack.c.l.b16 %v183
    %v224 = vunpack.c.l.b16 %v184
    %v225 = vunpack.c.l.b16 %v185
    %v226 = vunpack.c.l.b16 %v186
    %v227 = vunpack.c.l.b16 %v187
    %v228 = vunpack.c.l.b16 %v188
    %v229 = vunpack.c.l.b16 %v189
    %v230 = vpack.c.b16 %v215, %v214
    %v231 = vpack.c.b16 %v217, %v216
    %v232 = vpack.c.b16 %v219, %v218
    %v233 = vpack.c.b16 %v221, %v220
    %v234 = vpack.c.b16 %v223, %v222
    %v235 = vpack.c.b16 %v225, %v224
    %v236 = vpack.c.b16 %v227, %v226
    %v237 = vpack.c.b16 %v229, %v228
    %246 = vmatprep.subr.bf16.mxu0 0
    %247 = vmatpush1.bf16.msra.mxu0 %v230
    %248 = vmatprep.subr.bf16.mxu0 0
    %249 = vmatpush1.bf16.msra.mxu0 %v231
    %250 = vmatprep.subr.bf16.mxu0 0
    %251 = vmatpush1.bf16.msra.mxu0 %v232
    %252 = vmatprep.subr.bf16.mxu0 0
    %253 = vmatpush1.bf16.msra.mxu0 %v233
    %254 = vmatprep.subr.bf16.mxu0 0
    %255 = vmatpush1.bf16.msra.mxu0 %v234
    %256 = vmatprep.subr.bf16.mxu0 0
    %257 = vmatpush1.bf16.msra.mxu0 %v235
    %258 = vmatprep.subr.bf16.mxu0 0
    %259 = vmatpush1.bf16.msra.mxu0 %v236
    %260 = vmatprep.subr.bf16.mxu0 0
    %261 = vmatpush1.bf16.msra.mxu0 %v237
    %262 = vmatprep.subr.bf16.mxu0 0
    %263 = vmatpush1.bf16.msra.mxu0 0
    %264 = vmatprep.subr.bf16.mxu0 0
    %265 = vmatpush1.bf16.msra.mxu0 0
    %266 = vmatprep.subr.bf16.mxu0 0
    %267 = vmatpush1.bf16.msra.mxu0 0
    %268 = vmatprep.subr.bf16.mxu0 0
    %269 = vmatpush1.bf16.msra.mxu0 0
    %270 = vmatprep.subr.bf16.mxu0 0
    %271 = vmatpush1.bf16.msra.mxu0 0
    %272 = vmatprep.subr.bf16.mxu0 0
    %273 = vmatpush1.bf16.msra.mxu0 0
    %274 = vmatprep.subr.bf16.mxu0 0
    %275 = vmatpush1.bf16.msra.mxu0 0
    %276 = vmatprep.subr.bf16.mxu0 0
    %277 = vmatpush1.bf16.msra.mxu0 0
    %278 = vmatprep.mubr.bf16.mxu0 0
    %279 = vmatmul.mubr.bf16.gmra.mrb[0].mxu0 %v172
    %v280 = vpop.f32.mrb[0].mxu0
    %v281 = vadd.f32 %v196, %v280
    %v282 = vpop.f32.mrb[0].mxu0
    %v283 = vpop.f32.mrb[0].mxu0
    %v284 = vpop.f32.mrb[0].mxu0
    %285 = vdwg.mxu0
    %v286 = vmax.f32 %v281, 0.0
    %v287 = vpack.c.bf16 %v286, %v286
    %s288 = scalar_lea.vmem [#allocation5], 128
    %v289 = vld [vmem:[%s288] sm:$0xf]
    %v290 = vld [vmem:[%s288 + $0x4] sm:$0xf]
    %v291 = vld [vmem:[%s288 + $0x8] sm:$0xf]
    %v292 = vld [vmem:[%s288 + $0xc] sm:$0xf]
    %v293 = vld [vmem:[%s288 + $0x10] sm:$0xf]
    %v294 = vld [vmem:[%s288 + $0x14] sm:$0xf]
    %v295 = vld [vmem:[%s288 + $0x18] sm:$0xf]
    %v296 = vld [vmem:[%s288 + $0x1c] sm:$0xf]
    %v297 = vld [vmem:[%s288 + $0x20] sm:$0xf]
    %v298 = vld [vmem:[%s288 + $0x24] sm:$0xf]
    %v299 = vld [vmem:[%s288 + $0x28] sm:$0xf]
    %v300 = vld [vmem:[%s288 + $0x2c] sm:$0xf]
    %v301 = vld [vmem:[%s288 + $0x30] sm:$0xf]
    %v302 = vld [vmem:[%s288 + $0x34] sm:$0xf]
    %v303 = vld [vmem:[%s288 + $0x38] sm:$0xf]
    %v304 = vld [vmem:[%s288 + $0x3c] sm:$0xf]
    %s305 = scalar_lea.vmem [#allocation7], 2
    %v306 = vld [vmem:[%s305] sm:$0x1]
    %v308 = vlaneseq
    %v309 = vshrl.u32 %v308, 7
    %v310 = vsub.s32 0, %v309
    %v311 = vrot.slane %v306, %v310
    %v329 = vunpack.c.l.b16 %v289
    %v330 = vunpack.c.l.b16 %v290
    %v331 = vunpack.c.l.b16 %v291
    %v332 = vunpack.c.l.b16 %v292
    %v333 = vunpack.c.l.b16 %v293
    %v334 = vunpack.c.l.b16 %v294
    %v335 = vunpack.c.l.b16 %v295
    %v336 = vunpack.c.l.b16 %v296
    %v337 = vunpack.c.l.b16 %v297
    %v338 = vunpack.c.l.b16 %v298
    %v339 = vunpack.c.l.b16 %v299
    %v340 = vunpack.c.l.b16 %v300
    %v341 = vunpack.c.l.b16 %v301
    %v342 = vunpack.c.l.b16 %v302
    %v343 = vunpack.c.l.b16 %v303
    %v344 = vunpack.c.l.b16 %v304
    %v345 = vpack.c.b16 %v330, %v329
    %v346 = vpack.c.b16 %v332, %v331
    %v347 = vpack.c.b16 %v334, %v333
    %v348 = vpack.c.b16 %v336, %v335
    %v349 = vpack.c.b16 %v338, %v337
    %v350 = vpack.c.b16 %v340, %v339
    %v351 = vpack.c.b16 %v342, %v341
    %v352 = vpack.c.b16 %v344, %v343
    %361 = vmatprep.subr.bf16.mxu0 0
    %362 = vmatpush1.bf16.msra.mxu0 %v345
    %363 = vmatprep.subr.bf16.mxu0 0
    %364 = vmatpush1.bf16.msra.mxu0 %v346
    %365 = vmatprep.subr.bf16.mxu0 0
    %366 = vmatpush1.bf16.msra.mxu0 %v347
    %367 = vmatprep.subr.bf16.mxu0 0
    %368 = vmatpush1.bf16.msra.mxu0 %v348
    %369 = vmatprep.subr.bf16.mxu0 0
    %370 = vmatpush1.bf16.msra.mxu0 %v349
    %371 = vmatprep.subr.bf16.mxu0 0
    %372 = vmatpush1.bf16.msra.mxu0 %v350
    %373 = vmatprep.subr.bf16.mxu0 0
    %374 = vmatpush1.bf16.msra.mxu0 %v351
    %375 = vmatprep.subr.bf16.mxu0 0
    %376 = vmatpush1.bf16.msra.mxu0 %v352
    %377 = vmatprep.subr.bf16.mxu0 0
    %378 = vmatpush1.bf16.msra.mxu0 0
    %379 = vmatprep.subr.bf16.mxu0 0
    %380 = vmatpush1.bf16.msra.mxu0 0
    %381 = vmatprep.subr.bf16.mxu0 0
    %382 = vmatpush1.bf16.msra.mxu0 0
    %383 = vmatprep.subr.bf16.mxu0 0
    %384 = vmatpush1.bf16.msra.mxu0 0
    %385 = vmatprep.subr.bf16.mxu0 0
    %386 = vmatpush1.bf16.msra.mxu0 0
    %387 = vmatprep.subr.bf16.mxu0 0
    %388 = vmatpush1.bf16.msra.mxu0 0
    %389 = vmatprep.subr.bf16.mxu0 0
    %390 = vmatpush1.bf16.msra.mxu0 0
    %391 = vmatprep.subr.bf16.mxu0 0
    %392 = vmatpush1.bf16.msra.mxu0 0
    %393 = vmatprep.mubr.bf16.mxu0 0
    %394 = vmatmul.mubr.bf16.gmra.mrb[0].mxu0 %v287
    %v395 = vpop.f32.mrb[0].mxu0
    %v396 = vadd.f32 %v311, %v395
    %v397 = vpop.f32.mrb[0].mxu0
    %v398 = vpop.f32.mrb[0].mxu0
    %v399 = vpop.f32.mrb[0].mxu0
    %400 = vdwg.mxu0
    %v401 = vmax.f32 %v396, 0.0
    %v402 = vpack.c.bf16 %v401, %v401
    %s403 = scalar_lea.vmem [#allocation5], 192
    %v404 = vld [vmem:[%s403] sm:$0xf]
    %v405 = vld [vmem:[%s403 + $0x4] sm:$0xf]
    %v406 = vld [vmem:[%s403 + $0x8] sm:$0xf]
    %v407 = vld [vmem:[%s403 + $0xc] sm:$0xf]
    %v408 = vld [vmem:[%s403 + $0x10] sm:$0xf]
    %v409 = vld [vmem:[%s403 + $0x14] sm:$0xf]
    %v410 = vld [vmem:[%s403 + $0x18] sm:$0xf]
    %v411 = vld [vmem:[%s403 + $0x1c] sm:$0xf]
    %v412 = vld [vmem:[%s403 + $0x20] sm:$0xf]
    %v413 = vld [vmem:[%s403 + $0x24] sm:$0xf]
    %v414 = vld [vmem:[%s403 + $0x28] sm:$0xf]
    %v415 = vld [vmem:[%s403 + $0x2c] sm:$0xf]
    %v416 = vld [vmem:[%s403 + $0x30] sm:$0xf]
    %v417 = vld [vmem:[%s403 + $0x34] sm:$0xf]
    %v418 = vld [vmem:[%s403 + $0x38] sm:$0xf]
    %v419 = vld [vmem:[%s403 + $0x3c] sm:$0xf]
    %s420 = scalar_lea.vmem [#allocation7], 3
    %v421 = vld [vmem:[%s420] sm:$0x1]
    %v423 = vlaneseq
    %v424 = vshrl.u32 %v423, 7
    %v425 = vsub.s32 0, %v424
    %v426 = vrot.slane %v421, %v425
    %v444 = vunpack.c.l.b16 %v404
    %v445 = vunpack.c.l.b16 %v405
    %v446 = vunpack.c.l.b16 %v406
    %v447 = vunpack.c.l.b16 %v407
    %v448 = vunpack.c.l.b16 %v408
    %v449 = vunpack.c.l.b16 %v409
    %v450 = vunpack.c.l.b16 %v410
    %v451 = vunpack.c.l.b16 %v411
    %v452 = vunpack.c.l.b16 %v412
    %v453 = vunpack.c.l.b16 %v413
    %v454 = vunpack.c.l.b16 %v414
    %v455 = vunpack.c.l.b16 %v415
    %v456 = vunpack.c.l.b16 %v416
    %v457 = vunpack.c.l.b16 %v417
    %v458 = vunpack.c.l.b16 %v418
    %v459 = vunpack.c.l.b16 %v419
    %v460 = vpack.c.b16 %v445, %v444
    %v461 = vpack.c.b16 %v447, %v446
    %v462 = vpack.c.b16 %v449, %v448
    %v463 = vpack.c.b16 %v451, %v450
    %v464 = vpack.c.b16 %v453, %v452
    %v465 = vpack.c.b16 %v455, %v454
    %v466 = vpack.c.b16 %v457, %v456
    %v467 = vpack.c.b16 %v459, %v458
    %476 = vmatprep.subr.bf16.mxu0 0
    %477 = vmatpush1.bf16.msra.mxu0 %v460
    %478 = vmatprep.subr.bf16.mxu0 0
    %479 = vmatpush1.bf16.msra.mxu0 %v461
    %480 = vmatprep.subr.bf16.mxu0 0
    %481 = vmatpush1.bf16.msra.mxu0 %v462
    %482 = vmatprep.subr.bf16.mxu0 0
    %483 = vmatpush1.bf16.msra.mxu0 %v463
    %484 = vmatprep.subr.bf16.mxu0 0
    %485 = vmatpush1.bf16.msra.mxu0 %v464
    %486 = vmatprep.subr.bf16.mxu0 0
    %487 = vmatpush1.bf16.msra.mxu0 %v465
    %488 = vmatprep.subr.bf16.mxu0 0
    %489 = vmatpush1.bf16.msra.mxu0 %v466
    %490 = vmatprep.subr.bf16.mxu0 0
    %491 = vmatpush1.bf16.msra.mxu0 %v467
    %492 = vmatprep.subr.bf16.mxu0 0
    %493 = vmatpush1.bf16.msra.mxu0 0
    %494 = vmatprep.subr.bf16.mxu0 0
    %495 = vmatpush1.bf16.msra.mxu0 0
    %496 = vmatprep.subr.bf16.mxu0 0
    %497 = vmatpush1.bf16.msra.mxu0 0
    %498 = vmatprep.subr.bf16.mxu0 0
    %499 = vmatpush1.bf16.msra.mxu0 0
    %500 = vmatprep.subr.bf16.mxu0 0
    %501 = vmatpush1.bf16.msra.mxu0 0
    %502 = vmatprep.subr.bf16.mxu0 0
    %503 = vmatpush1.bf16.msra.mxu0 0
    %504 = vmatprep.subr.bf16.mxu0 0
    %505 = vmatpush1.bf16.msra.mxu0 0
    %506 = vmatprep.subr.bf16.mxu0 0
    %507 = vmatpush1.bf16.msra.mxu0 0
    %508 = vmatprep.mubr.bf16.mxu0 0
    %509 = vmatmul.mubr.bf16.gmra.mrb[0].mxu0 %v402
    %v510 = vpop.f32.mrb[0].mxu0
    %v511 = vadd.f32 %v426, %v510
    %v512 = vpop.f32.mrb[0].mxu0
    %v513 = vpop.f32.mrb[0].mxu0
    %v514 = vpop.f32.mrb[0].mxu0
    %515 = vdwg.mxu0
    %v516 = vmax.f32 %v511, 0.0
    %v517 = vpack.c.bf16 %v516, %v516
    %518 = vst [vmem:[%s3] sm:$0xf] %v517
    // Predicated region
    $region26: #{nn_forward.1} parent=1 // pred_check
      _
    $region27: #{nn_forward.1} parent=1 // pred_check_branch
      %520 = sbr.rel (0) target = $region29
    $region28: #{nn_forward.1} parent=1 // pred_region
      _
    $region29: #{nn_forward.1} parent=1 // pred_fallthru
      _
    // Predicated region
    $region30: #{nn_forward.1} parent=1 // pred_check
      _
    $region31: #{nn_forward.1} parent=1 // pred_check_branch
      %522 = sbr.rel (0) target = $region33
    $region32: #{nn_forward.1} parent=1 // pred_region
      _
    $region33: #{nn_forward.1} parent=1 // pred_fallthru
      _
    %523 = vsyncpa [#allocation4], 1
    %524 = vsyncpa [#allocation6], 1

</llo_original>
